<compile_context>
chip_gen: v5e
topology: v5e:2x2
jax: 0.10.0
libtpu: 0.0.40
codegen_flags: <defaults>
</compile_context>

<pallas_src>
import jax
import jax.numpy as jnp
from jax.experimental import pallas as pl
from jax.experimental.pallas import tpu as pltpu


def _posenc_kernel(x_ref, pos_ref, o_ref):
    # x_ref: (bb, pb, E)   pos_ref: (1, pb, E)   o_ref: (bb, pb, E)
    # Single elementwise VPU add; pos broadcasts over the batch-block axis.
    # Explicit cast keeps the store a clean lane-dense vst even with mixed dtypes.
    o_ref[...] = (x_ref[...] + pos_ref[...]).astype(o_ref.dtype)


def _largest_divisor_leq(n: int, cap: int) -> int:
    """Largest divisor of n that is <= cap (>= 1)."""
    cap = max(1, min(n, cap))
    for d in range(cap, 0, -1):
        if n % d == 0:
            return d
    return 1


def _choose_patch_block(P: int, E: int, itemsize: int, max_block_bytes: int) -> int:
    """Patch-axis (sublane) block size: full P if it fits, else a multiple-of-8
    divisor of P that keeps one (1, pb, E) slab within the block budget."""
    slab_bytes = P * E * itemsize
    if slab_bytes <= max_block_bytes:
        return P
    if P % 8 != 0:
        # Cannot legally sub-tile the sublane axis (8,128 rule); keep the full dim.
        return P
    cap_rows = max(8, (max_block_bytes // (E * itemsize)) // 8 * 8)
    d = (min(cap_rows, P) // 8) * 8
    while d > 8 and P % d != 0:
        d -= 8
    return max(d, 8)  # 8 always divides P here -> tail blocks stay full-size


def positional_encoding_learned(x, pos, *, max_block_bytes=2 * 1024 * 1024,
                                donate_x=False):
    """x: (B, P, E).  pos: (1, P, E) learned embedding.  Returns x + pos."""
    B, P, E = x.shape
    assert pos.shape == (1, P, E), f"pos shape {pos.shape} != (1, {P}, {E})"

    out_dtype = jnp.result_type(x.dtype, pos.dtype)
    # Conservative per-element size for the VMEM budget (covers x, pos and out).
    itemsize = max(x.dtype.itemsize, pos.dtype.itemsize, jnp.dtype(out_dtype).itemsize)

    # ---- choose the patch (sublane) block ---------------------------------
    pb = _choose_patch_block(P, E, itemsize, max_block_bytes)
    slab_bytes = P * E * itemsize

    # ---- choose the batch block --------------------------------------------
    if pb < P:
        # One (1, P, E) slab already exceeds the budget: one batch row per block,
        # tile over the patch axis instead (grid already has >= 2 steps).
        bb = 1
    else:
        bb = max(1, min(B, max_block_bytes // max(slab_bytes, 1)))
        if B * slab_bytes > max_block_bytes:
            # Problem is big enough to split: guarantee >= 2 batch blocks so both
            # of v7x's TensorCores get work under dimension_semantics="parallel".
            bb = min(bb, pl.cdiv(B, 2))
        # Round down to a divisor of B: no ragged final block -> every store is a
        # full, unmasked lane-dense slab.
        bb = _largest_divisor_leq(B, bb)

    grid = (pl.cdiv(B, bb), pl.cdiv(P, pb))

    grid_spec = pltpu.PrefetchScalarGridSpec(
        num_scalar_prefetch=0,
        grid=grid,
        in_specs=[
            # Activation block, tiled over (batch, patch). E is always the full
            # trailing dim -> lane-dense; pb is either full P or a multiple of 8.
            pl.BlockSpec((bb, pb, E), lambda i, j: (i, j, 0)),
            # Positional embedding: batch-block index is constant, so it is only
            # re-fetched when the patch block changes (never when pb == P).
            pl.BlockSpec((1, pb, E), lambda i, j: (0, j, 0)),
        ],
        out_specs=pl.BlockSpec((bb, pb, E), lambda i, j: (i, j, 0)),
        scratch_shapes=[],
    )

    call_kwargs = {}
    if donate_x:
        if jnp.dtype(out_dtype) != x.dtype:
            raise ValueError("donate_x requires the output dtype to match x.dtype")
        call_kwargs["input_output_aliases"] = {0: 0}

    return pl.pallas_call(
        _posenc_kernel,
        out_shape=jax.ShapeDtypeStruct((B, P, E), out_dtype),
        grid_spec=grid_spec,
        compiler_params=pltpu.CompilerParams(
            dimension_semantics=("parallel", "parallel")),
        **call_kwargs,
    )(x, pos)


def reference_forward(x, pos):
    """Pure-JAX reference: identical math to the PyTorch module's forward."""
    return x + pos


if __name__ == "__main__":
    # Module defaults: num_patches=16, embedding_dim=256 (nn.Parameter of shape
    # (1, num_patches, embedding_dim)); small batch of 2.
    B, P, E = 2, 16, 256

    key = jax.random.PRNGKey(0)
    kx, kp = jax.random.split(key)
    x = jax.random.normal(kx, (B, P, E), dtype=jnp.float32)
    pos = jax.random.normal(kp, (1, P, E), dtype=jnp.float32)  # learned parameter

    # 1) Default path: tiny problem -> a single grid step.
    out = jax.block_until_ready(positional_encoding_learned(x, pos))
    ref = jax.block_until_ready(reference_forward(x, pos))
    assert out.shape == ref.shape and out.dtype == ref.dtype
    assert jnp.allclose(out, ref, atol=1e-6, rtol=1e-6), "mismatch vs reference"

    # 2) Shrunk block budget: exercises the batch/patch tiling fallback paths
    #    (bb=1, pb=8 -> grid=(2, 2)) on-device with the same tiny arrays.
    out_tiled = jax.block_until_ready(
        positional_encoding_learned(x, pos, max_block_bytes=8 * 1024))
    assert jnp.allclose(out_tiled, ref, atol=1e-6, rtol=1e-6), "tiled path mismatch"

    # 3) Mixed dtypes: bf16 activations with an f32 learned embedding.
    x_bf16 = x.astype(jnp.bfloat16)
    out_mixed = jax.block_until_ready(positional_encoding_learned(x_bf16, pos))
    ref_mixed = jax.block_until_ready(reference_forward(x_bf16, pos))
    assert out_mixed.dtype == ref_mixed.dtype
    assert jnp.allclose(out_mixed, ref_mixed, atol=1e-2, rtol=1e-2), "mixed-dtype mismatch"

    print("KERNEL_OK")
</pallas_src>

<mosaic_0001>
module attributes {stable_mosaic.version = 11 : i64} {
  func.func @_posenc_kernel(%arg0: i32, %arg1: i32, %arg2: memref<2x16x256xf32, #tpu.memory_space<vmem>>, %arg3: memref<1x16x256xf32, #tpu.memory_space<vmem>>, %arg4: memref<2x16x256xf32, #tpu.memory_space<vmem>>) attributes {dimension_semantics = [#tpu.dimension_semantics<parallel>, #tpu.dimension_semantics<parallel>], iteration_bounds = array<i64: 1, 1>, scalar_prefetch = 0 : i64, scratch_operands = 0 : i64, tpu.core_type = #tpu.core_type<tc>, window_params = [{transform_indices = @transform_0, window_bounds = array<i64: 2, 16, 256>}, {transform_indices = @transform_1, window_bounds = array<i64: 1, 16, 256>}, {transform_indices = @transform_2, window_bounds = array<i64: 2, 16, 256>}]} {
    %c0 = arith.constant 0 : index
    %c0_0 = arith.constant 0 : index
    %c0_1 = arith.constant 0 : index
    %0 = vector.load %arg2[%c0, %c0_0, %c0_1] : memref<2x16x256xf32, #tpu.memory_space<vmem>>, vector<2x16x256xf32>
    %c0_2 = arith.constant 0 : index
    %c0_3 = arith.constant 0 : index
    %c0_4 = arith.constant 0 : index
    %1 = vector.load %arg3[%c0_2, %c0_3, %c0_4] : memref<1x16x256xf32, #tpu.memory_space<vmem>>, vector<1x16x256xf32>
    %2 = vector.broadcast %1 : vector<1x16x256xf32> to vector<2x16x256xf32>
    %3 = arith.addf %0, %2 : vector<2x16x256xf32>
    %c0_5 = arith.constant 0 : index
    %c0_6 = arith.constant 0 : index
    %c0_7 = arith.constant 0 : index
    %4 = vector.load %arg4[%c0_5, %c0_6, %c0_7] : memref<2x16x256xf32, #tpu.memory_space<vmem>>, vector<2x16x256xf32>
    tpu.vector_store %arg4[%c0_5, %c0_6, %c0_7], %3 {strides = array<i32>} : memref<2x16x256xf32, #tpu.memory_space<vmem>>, vector<2x16x256xf32>,
    return
  }
  func.func @transform_0(%arg0: i32, %arg1: i32) -> (i32, i32, i32) {
    %c0_i32 = arith.constant 0 : i32
    %c0_i32_0 = arith.constant 0 : i32
    return %arg0, %arg1, %c0_i32 : i32, i32, i32
  }
  func.func @transform_1(%arg0: i32, %arg1: i32) -> (i32, i32, i32) {
    %c0_i32 = arith.constant 0 : i32
    %c0_i32_0 = arith.constant 0 : i32
    %c0_i32_1 = arith.constant 0 : i32
    return %c0_i32, %arg1, %c0_i32_0 : i32, i32, i32
  }
  func.func @transform_2(%arg0: i32, %arg1: i32) -> (i32, i32, i32) {
    %c0_i32 = arith.constant 0 : i32
    %c0_i32_0 = arith.constant 0 : i32
    return %arg0, %arg1, %c0_i32 : i32, i32, i32
  }
}

</mosaic_0001>

<llo_original>
// kernel: tpu_custom_call.1
$region0: #{tpu_custom_call.1}
  #allocation0 [shape = 'u32[]', space=smem, size = 0x4, offset = 0x4, fixed_abs, tag = 'smem constant byte address 0x4 - core index']
  #allocation1 [shape = 'u32[72,128]{1,0:T(1,128)}', space=vmem, size = 0x9000, scoped, tag = 'internal scratch']
  %s0 = inlined_call_operand.hbm [shape: f32[2,16,256], index: 0, kind: input, shape index: {}]
  %s1 = inlined_call_operand.hbm [shape: f32[1,16,256], index: 1, kind: input, shape index: {}]
  %s2 = inlined_call_operand.hbm [shape: f32[2,16,256], index: 2, kind: output, shape index: {}]
  %s3 = sld [smem:[#allocation0]]
  $region26: #{tpu_custom_call.1} parent=0
    _
  %s5 = ssub.s32 1, %s3
  %s6 = scalar_select 0, %s5, %s3
  $region1: #{tpu_custom_call.1} parent=0
    #allocation2 [shape = 'u8[32768]{0}', space=vmem, size = 0x8000, scoped, tag = 'input window, operand 0, single buffered']
    #allocation3 [shape = 's32[1]{0}', space=sflag, size = 0x4, scoped, tag = 'scoped memory for tpu_custom_call.1']
    #allocation4 [shape = 's32[1]{0}', space=sflag, size = 0x4, scoped, tag = 'scoped memory for tpu_custom_call.1']
    #allocation5 [shape = 'u8[16384]{0}', space=vmem, size = 0x4000, scoped, tag = 'input window, operand 1, single buffered']
    #allocation6 [shape = 's32[1]{0}', space=sflag, size = 0x4, scoped, tag = 'scoped memory for tpu_custom_call.1']
    #allocation7 [shape = 'u8[32768]{0}', space=vmem, size = 0x8000, scoped, tag = 'output window, operand 0, single buffered']
    %7 = vsyncpa [#allocation3], 0
    %8 = vsyncpa [#allocation6], 0
    %9 = vsyncpa [#allocation4], 0
    // Predicated region
    $region2: #{tpu_custom_call.1} parent=1 // pred_check
      _
    $region3: #{tpu_custom_call.1} parent=1 // pred_check_branch
      %11 = sbr.rel (0) target = $region5
    $region4: #{tpu_custom_call.1} parent=1 // pred_region
      %13 = vsyncadd [#allocation3], 0
      %s14 = sshll.u32 %s0, 4
      %s15 = int_to_ptr.hbm [resolvable:$true] %s14
      %s16 = sshll.u32 [#allocation2], 4
      %s17 = int_to_ptr.vmem [resolvable:$true] %s16
      %22 = dma.hbm_to_vmem [thread:$0]  %s15, 1024, %s17, [#allocation3], 256, 256, 16
    $region5: #{tpu_custom_call.1} parent=1 // pred_fallthru
      _
    // Predicated region
    $region6: #{tpu_custom_call.1} parent=1 // pred_check
      _
    $region7: #{tpu_custom_call.1} parent=1 // pred_check_branch
      %24 = sbr.rel (0) target = $region9
    $region8: #{tpu_custom_call.1} parent=1 // pred_region
      %26 = vsyncadd [#allocation6], 0
      %s27 = sshll.u32 %s1, 4
      %s28 = int_to_ptr.hbm [resolvable:$true] %s27
      %s29 = sshll.u32 [#allocation5], 4
      %s30 = int_to_ptr.vmem [resolvable:$true] %s29
      %35 = dma.hbm_to_vmem [thread:$0]  %s28, 512, %s30, [#allocation6], 256, 256, 16
    $region9: #{tpu_custom_call.1} parent=1 // pred_fallthru
      _
    // Predicated region
    $region10: #{tpu_custom_call.1} parent=1 // pred_check
      _
    $region11: #{tpu_custom_call.1} parent=1 // pred_check_branch
      %37 = sbr.rel (0) target = $region13
    $region12: #{tpu_custom_call.1} parent=1 // pred_region
      %39 = dma.done [#allocation3], 1024
    $region13: #{tpu_custom_call.1} parent=1 // pred_fallthru
      _
    // Predicated region
    $region14: #{tpu_custom_call.1} parent=1 // pred_check
      _
    $region15: #{tpu_custom_call.1} parent=1 // pred_check_branch
      %41 = sbr.rel (0) target = $region17
    $region16: #{tpu_custom_call.1} parent=1 // pred_region
      %43 = dma.done [#allocation6], 512
    $region17: #{tpu_custom_call.1} parent=1 // pred_fallthru
      _
    %v44 = vld [vmem:[#allocation2] sm:$0xff]
    %v45 = vld [vmem:[#allocation2 + $0x8] sm:$0xff]
    %v46 = vld [vmem:[#allocation2 + $0x10] sm:$0xff]
    %v47 = vld [vmem:[#allocation2 + $0x18] sm:$0xff]
    %v48 = vld [vmem:[#allocation2 + $0x20] sm:$0xff]
    %v49 = vld [vmem:[#allocation2 + $0x28] sm:$0xff]
    %v50 = vld [vmem:[#allocation2 + $0x30] sm:$0xff]
    %v51 = vld [vmem:[#allocation2 + $0x38] sm:$0xff]
    %v52 = vld [vmem:[#allocation5] sm:$0xff]
    %v53 = vld [vmem:[#allocation5 + $0x8] sm:$0xff]
    %v54 = vld [vmem:[#allocation5 + $0x10] sm:$0xff]
    %v55 = vld [vmem:[#allocation5 + $0x18] sm:$0xff]
    %v56 = vadd.f32 %v44, %v52
    %v57 = vadd.f32 %v45, %v53
    %v58 = vadd.f32 %v46, %v54
    %v59 = vadd.f32 %v47, %v55
    %v60 = vadd.f32 %v48, %v52
    %v61 = vadd.f32 %v49, %v53
    %v62 = vadd.f32 %v50, %v54
    %v63 = vadd.f32 %v51, %v55
    %64 = vst [vmem:[#allocation7] sm:$0xff] %v56
    %65 = vst [vmem:[#allocation7 + $0x8] sm:$0xff] %v57
    %66 = vst [vmem:[#allocation7 + $0x10] sm:$0xff] %v58
    %67 = vst [vmem:[#allocation7 + $0x18] sm:$0xff] %v59
    %68 = vst [vmem:[#allocation7 + $0x20] sm:$0xff] %v60
    %69 = vst [vmem:[#allocation7 + $0x28] sm:$0xff] %v61
    %70 = vst [vmem:[#allocation7 + $0x30] sm:$0xff] %v62
    %71 = vst [vmem:[#allocation7 + $0x38] sm:$0xff] %v63
    // Predicated region
    $region18: #{tpu_custom_call.1} parent=1 // pred_check
      _
    $region19: #{tpu_custom_call.1} parent=1 // pred_check_branch
      %73 = sbr.rel (0) target = $region21
    $region20: #{tpu_custom_call.1} parent=1 // pred_region
      %75 = vsyncadd [#allocation4], 0
      %s76 = sshll.u32 [#allocation7], 4
      %s77 = int_to_ptr.vmem [resolvable:$true] %s76
      %s78 = sshll.u32 %s2, 4
      %s79 = int_to_ptr.hbm [resolvable:$true] %s78
      %84 = dma.vmem_to_hbm [thread:$0]  %s77, 1024, %s79, [#allocation4], 256, 256, 16
    $region21: #{tpu_custom_call.1} parent=1 // pred_fallthru
      _
    // Predicated region
    $region22: #{tpu_custom_call.1} parent=1 // pred_check
      _
    $region23: #{tpu_custom_call.1} parent=1 // pred_check_branch
      %86 = sbr.rel (0) target = $region25
    $region24: #{tpu_custom_call.1} parent=1 // pred_region
      %88 = dma.done [#allocation4], 1024
    $region25: #{tpu_custom_call.1} parent=1 // pred_fallthru
      _
    %89 = vsyncpa [#allocation3], 1
    %90 = vsyncpa [#allocation6], 1
    %91 = vsyncpa [#allocation4], 1

</llo_original>
